<compile_context>
chip_gen: v6e
topology: v6e:2x2x1
jax: 0.10.0
libtpu: 0.0.40
codegen_flags: <defaults>
</compile_context>

<pallas_src>
import functools

import jax
import jax.numpy as jnp
from jax.experimental import pallas as pl
from jax.experimental.pallas import tpu as pltpu


HP = 128  # lane-dense padded feature width (action lives in lane H)


def _round_up(x, m):
    return ((x + m - 1) // m) * m


def _dynamics_kernel(x_ref, w1_ref, b1_ref, wc_ref, bc_ref, o_ref, *,
                     hidden_size):
    """Fused DynamicsNet MLP for one batch tile.

    x_ref : (TB, HP) bf16   [hidden | action @ lane H | zeros]
    w1    : (HP, HP) bf16   l1 weights (rows :H hidden, row H = action row)
    b1    : (1, HP)  f32
    wc    : (HP, HP) bf16   [ l2 (cols :H) | reward (col H) | zeros ]
    bc    : (1, HP)  f32    [ b2 | b_reward | zeros ]
    o_ref : (TB, HP) bf16   [ relu(l2(h1)) | reward(h1) @ lane H | zeros ]
    """
    x = x_ref[...]

    # l1 (hidden + action): MXU matmul with f32 accumulation; bias + ReLU in
    # f32 on the VPU.
    h1 = jnp.dot(x, w1_ref[...], preferred_element_type=jnp.float32)
    h1 = jnp.maximum(h1 + b1_ref[...], 0.0)

    # Fused l2 + reward head: one MXU pass into a single 128-lane slab.
    z = jnp.dot(h1.astype(wc_ref.dtype), wc_ref[...],
                preferred_element_type=jnp.float32) + bc_ref[...]

    # ReLU only on lanes < H (new_hidden); lane H is the reward (no ReLU),
    # lanes > H are exactly zero by construction of wc/bc.
    lane = jax.lax.broadcasted_iota(jnp.int32, z.shape, 1)
    out = jnp.where(lane < hidden_size, jnp.maximum(z, 0.0), z)
    o_ref[...] = out.astype(o_ref.dtype)


def _pick_tile(batch, block_b, align=16):
    """(tile_rows, padded_batch): minimize padding, keep tile <= block_b, and
    use >=2 tiles for mid/large batches so both v7x TensorCores get work."""
    block_b = min(block_b, 8192)   # double-buffered bf16 in+out << scoped VMEM
    n_tiles = max(1, pl.cdiv(batch, block_b))
    if batch >= 2 * align:
        n_tiles = max(n_tiles, 2)
    tb = _round_up(pl.cdiv(batch, n_tiles), align)
    bp = _round_up(batch, tb)
    return tb, bp


def dynamics_forward(hidden, action, params, *, block_b=2048,
                     return_padded=False):
    """hidden: (B, H) or pre-padded (B, HP); action: scalar, (B,) or (B, 1)."""
    H = params["hidden_size"]
    hp = params["w1p"].shape[0]
    assert H < hp, "need a spare lane for the action"

    hidden = jnp.asarray(hidden, jnp.float32)
    B = hidden.shape[0]
    assert hidden.shape[1] in (H, hp), (
        f"hidden width {hidden.shape[1]} must be {H} or the padded {hp}")

    action = jnp.asarray(action, jnp.float32).reshape(-1)
    if action.shape[0] == 1 and B > 1:
        # Matches the PyTorch int-action path: expand to the batch.
        action = jnp.broadcast_to(action, (B,))

    # Lane-dense input slab with the action folded into lane H (a lane that is
    # zero-padded anyway), then cast to bf16 for HBM traffic.
    if hidden.shape[1] == hp:
        x = hidden
    else:
        x = jnp.pad(hidden, ((0, 0), (0, hp - H)))
    x = x.at[:, H].set(action).astype(jnp.bfloat16)

    tb, bp = _pick_tile(B, block_b)
    if bp != B:
        x = jnp.pad(x, ((0, bp - B), (0, 0)))

    kernel = functools.partial(_dynamics_kernel, hidden_size=H)

    out = pl.pallas_call(
        kernel,
        out_shape=jax.ShapeDtypeStruct((bp, hp), jnp.bfloat16),
        grid_spec=pltpu.PrefetchScalarGridSpec(
            num_scalar_prefetch=0,
            grid=(bp // tb,),
            in_specs=[
                pl.BlockSpec((tb, hp), lambda i: (i, 0)),    # input tile
                pl.BlockSpec((hp, hp), lambda i: (0, 0)),    # w1 (resident)
                pl.BlockSpec((1, hp), lambda i: (0, 0)),     # b1
                pl.BlockSpec((hp, hp), lambda i: (0, 0)),    # [w2 | wr]
                pl.BlockSpec((1, hp), lambda i: (0, 0)),     # [b2 | br]
            ],
            out_specs=pl.BlockSpec((tb, hp), lambda i: (i, 0)),
        ),
        compiler_params=pltpu.CompilerParams(
            dimension_semantics=("parallel",)),
    )(x, params["w1p"], params["b1p"], params["wcp"], params["bcp"])

    reward = out[:B, H:H + 1].astype(jnp.float32)
    if return_padded:
        # TODO(synk): in a tight MCTS loop keep the hidden state in this
        # padded bf16 layout between dynamics calls to skip pad/slice passes.
        return out[:B], reward
    new_hidden = out[:B, :H].astype(jnp.float32)
    return new_hidden, reward


def init_params(key, hidden_size, hp=HP):
    """Synthetic init matching nn.Linear fan-in scaling."""
    assert hidden_size < hp
    k1, k2, k3, k4, k5, k6 = jax.random.split(key, 6)
    H = hidden_size
    in1 = H + 1
    s1 = 1.0 / jnp.sqrt(in1)
    s2 = 1.0 / jnp.sqrt(H)

    # Logical weights (in_features, out_features) for the pure-JAX reference.
    w1 = jax.random.uniform(k1, (in1, H), jnp.float32, -s1, s1)
    b1 = jax.random.uniform(k2, (H,), jnp.float32, -s1, s1)
    w2 = jax.random.uniform(k3, (H, H), jnp.float32, -s2, s2)
    b2 = jax.random.uniform(k4, (H,), jnp.float32, -s2, s2)
    wr = jax.random.uniform(k5, (H, 1), jnp.float32, -s2, s2)
    br = jax.random.uniform(k6, (1,), jnp.float32, -s2, s2)

    # Packed, zero-padded, lane-dense kernel params.  Weights are bf16
    # (HBM-resident); biases stay f32 for the f32 VPU epilogue.
    w1p = (jnp.zeros((hp, hp), jnp.float32)
           .at[:H + 1, :H].set(w1)                 # row H is the action row
           .astype(jnp.bfloat16))
    b1p = jnp.zeros((1, hp), jnp.float32).at[0, :H].set(b1)
    wcp = (jnp.zeros((hp, hp), jnp.float32)
           .at[:H, :H].set(w2)
           .at[:H, H].set(wr[:, 0])                # reward packed into lane H
           .astype(jnp.bfloat16))
    bcp = (jnp.zeros((1, hp), jnp.float32)
           .at[0, :H].set(b2)
           .at[0, H].set(br[0]))

    return {
        "hidden_size": H,
        "w1p": w1p, "b1p": b1p, "wcp": wcp, "bcp": bcp,
        # logical f32 copies for the reference implementation
        "w1": w1, "b1": b1, "w2": w2, "b2": b2, "wr": wr, "br": br,
    }


def _reference(hidden, action, params):
    x = jnp.concatenate(
        [jnp.asarray(hidden, jnp.float32),
         jnp.asarray(action, jnp.float32).reshape(-1, 1)], axis=-1)
    h1 = jax.nn.relu(x @ params["w1"] + params["b1"])
    new_hidden = jax.nn.relu(h1 @ params["w2"] + params["b2"])
    reward = h1 @ params["wr"] + params["br"]
    return new_hidden, reward


if __name__ == "__main__":
    key = jax.random.PRNGKey(0)
    k_p, k_h, k_a = jax.random.split(key, 3)

    batch = 2
    hidden_size = 32
    action_size = 9  # tic-tac-toe: only affects valid action values, not shapes

    params = init_params(k_p, hidden_size)
    hidden = jax.random.normal(k_h, (batch, hidden_size), jnp.float32)
    action = jax.random.randint(k_a, (batch,), 0, action_size)

    fwd = functools.partial(dynamics_forward, params=params)
    new_hidden, reward = fwd(hidden, action)
    jax.block_until_ready((new_hidden, reward))

    ref_nh, ref_r = _reference(hidden, action, params)
    assert new_hidden.shape == (batch, hidden_size), new_hidden.shape
    assert reward.shape == (batch, 1), reward.shape
    # bf16 weights / activations -> tolerance loosened vs the f32 reference.
    assert jnp.allclose(new_hidden, ref_nh, atol=5e-2, rtol=5e-2), (
        float(jnp.max(jnp.abs(new_hidden - ref_nh))))
    assert jnp.allclose(reward, ref_r, atol=5e-2, rtol=5e-2), (
        float(jnp.max(jnp.abs(reward - ref_r))))

    print("KERNEL_OK")
</pallas_src>

<mosaic_0001>
module attributes {stable_mosaic.version = 11 : i64} {
  func.func @_dynamics_kernel(%arg0: i32, %arg1: memref<16x128xbf16, #tpu.memory_space<vmem>>, %arg2: memref<128x128xbf16, #tpu.memory_space<vmem>>, %arg3: memref<1x128xf32, #tpu.memory_space<vmem>>, %arg4: memref<128x128xbf16, #tpu.memory_space<vmem>>, %arg5: memref<1x128xf32, #tpu.memory_space<vmem>>, %arg6: memref<16x128xbf16, #tpu.memory_space<vmem>>) attributes {dimension_semantics = [#tpu.dimension_semantics<parallel>], iteration_bounds = array<i64: 1>, scalar_prefetch = 0 : i64, scratch_operands = 0 : i64, tpu.core_type = #tpu.core_type<tc>, window_params = [{transform_indices = @transform_0, window_bounds = array<i64: 16, 128>}, {pipeline_mode = #tpu.pipeline_mode<synchronous>, transform_indices = @transform_1, window_bounds = array<i64: 128, 128>}, {pipeline_mode = #tpu.pipeline_mode<synchronous>, transform_indices = @transform_2, window_bounds = array<i64: 1, 128>}, {pipeline_mode = #tpu.pipeline_mode<synchronous>, transform_indices = @transform_3, window_bounds = array<i64: 128, 128>}, {pipeline_mode = #tpu.pipeline_mode<synchronous>, transform_indices = @transform_4, window_bounds = array<i64: 1, 128>}, {transform_indices = @transform_5, window_bounds = array<i64: 16, 128>}]} {
    %c0 = arith.constant 0 : index
    %c0_0 = arith.constant 0 : index
    %0 = vector.load %arg1[%c0, %c0_0] : memref<16x128xbf16, #tpu.memory_space<vmem>>, vector<16x128xbf16>
    %c0_1 = arith.constant 0 : index
    %c0_2 = arith.constant 0 : index
    %1 = vector.load %arg2[%c0_1, %c0_2] : memref<128x128xbf16, #tpu.memory_space<vmem>>, vector<128x128xbf16>
    %cst = arith.constant dense<0.000000e+00> : vector<16x128xf32>
    %2 = tpu.matmul %0, %1, %cst {dimension_numbers = #tpu.dot_dimension_numbers<[1], [0], [0], [1], [0, 0, 1, 1], [], []>} : vector<16x128xbf16>, vector<128x128xbf16>, vector<16x128xf32> -> vector<16x128xf32>
    %c0_3 = arith.constant 0 : index
    %c0_4 = arith.constant 0 : index
    %3 = vector.load %arg3[%c0_3, %c0_4] : memref<1x128xf32, #tpu.memory_space<vmem>>, vector<1x128xf32>
    %4 = vector.broadcast %3 : vector<1x128xf32> to vector<16x128xf32>
    %5 = arith.addf %2, %4 : vector<16x128xf32>
    %cst_5 = arith.constant 0.000000e+00 : f32
    %6 = vector.broadcast %cst_5 : f32 to vector<16x128xf32>
    %7 = arith.maximumf %5, %6 : vector<16x128xf32>
    %8 = arith.truncf %7 : vector<16x128xf32> to vector<16x128xbf16>
    %c0_6 = arith.constant 0 : index
    %c0_7 = arith.constant 0 : index
    %9 = vector.load %arg4[%c0_6, %c0_7] : memref<128x128xbf16, #tpu.memory_space<vmem>>, vector<128x128xbf16>
    %cst_8 = arith.constant dense<0.000000e+00> : vector<16x128xf32>
    %10 = tpu.matmul %8, %9, %cst_8 {dimension_numbers = #tpu.dot_dimension_numbers<[1], [0], [0], [1], [0, 0, 1, 1], [], []>} : vector<16x128xbf16>, vector<128x128xbf16>, vector<16x128xf32> -> vector<16x128xf32>
    %c0_9 = arith.constant 0 : index
    %c0_10 = arith.constant 0 : index
    %11 = vector.load %arg5[%c0_9, %c0_10] : memref<1x128xf32, #tpu.memory_space<vmem>>, vector<1x128xf32>
    %12 = vector.broadcast %11 : vector<1x128xf32> to vector<16x128xf32>
    %13 = arith.addf %10, %12 : vector<16x128xf32>
    %14 = tpu.iota {dimensions = array<i32: 1>} : vector<16x128xi32>
    %c32_i32 = arith.constant 32 : i32
    %15 = vector.broadcast %c32_i32 : i32 to vector<16x128xi32>
    %16 = arith.cmpi slt, %14, %15 : vector<16x128xi32>
    %cst_11 = arith.constant 0.000000e+00 : f32
    %17 = vector.broadcast %cst_11 : f32 to vector<16x128xf32>
    %18 = arith.maximumf %13, %17 : vector<16x128xf32>
    %19 = arith.select %16, %18, %13 : vector<16x128xi1>, vector<16x128xf32>
    %20 = arith.truncf %19 : vector<16x128xf32> to vector<16x128xbf16>
    %c0_12 = arith.constant 0 : index
    %c0_13 = arith.constant 0 : index
    %21 = vector.load %arg6[%c0_12, %c0_13] : memref<16x128xbf16, #tpu.memory_space<vmem>>, vector<16x128xbf16>
    tpu.vector_store %arg6[%c0_12, %c0_13], %20 {strides = array<i32>} : memref<16x128xbf16, #tpu.memory_space<vmem>>, vector<16x128xbf16>,
    return
  }
  func.func @transform_0(%arg0: i32) -> (i32, i32) {
    %c0_i32 = arith.constant 0 : i32
    %c0_i32_0 = arith.constant 0 : i32
    return %arg0, %c0_i32 : i32, i32
  }
  func.func @transform_1(%arg0: i32) -> (i32, i32) {
    %c0_i32 = arith.constant 0 : i32
    %c0_i32_0 = arith.constant 0 : i32
    %c0_i32_1 = arith.constant 0 : i32
    return %c0_i32, %c0_i32_0 : i32, i32
  }
  func.func @transform_2(%arg0: i32) -> (i32, i32) {
    %c0_i32 = arith.constant 0 : i32
    %c0_i32_0 = arith.constant 0 : i32
    %c0_i32_1 = arith.constant 0 : i32
    return %c0_i32, %c0_i32_0 : i32, i32
  }
  func.func @transform_3(%arg0: i32) -> (i32, i32) {
    %c0_i32 = arith.constant 0 : i32
    %c0_i32_0 = arith.constant 0 : i32
    %c0_i32_1 = arith.constant 0 : i32
    return %c0_i32, %c0_i32_0 : i32, i32
  }
  func.func @transform_4(%arg0: i32) -> (i32, i32) {
    %c0_i32 = arith.constant 0 : i32
    %c0_i32_0 = arith.constant 0 : i32
    %c0_i32_1 = arith.constant 0 : i32
    return %c0_i32, %c0_i32_0 : i32, i32
  }
  func.func @transform_5(%arg0: i32) -> (i32, i32) {
    %c0_i32 = arith.constant 0 : i32
    %c0_i32_0 = arith.constant 0 : i32
    return %arg0, %c0_i32 : i32, i32
  }
}

</mosaic_0001>

<llo_original>
// kernel: tpu_custom_call.1
$region0: #{tpu_custom_call.1}
  #allocation0 [shape = 'u32[]', space=smem, size = 0x4, offset = 0x4, fixed_abs, tag = 'smem constant byte address 0x4 - core index']
  #allocation1 [shape = 'u32[144,128]{1,0:T(1,128)}', space=vmem, size = 0x12000, scoped, tag = 'internal scratch']
  %s0 = inlined_call_operand.hbm [shape: bf16[16,128], index: 0, kind: input, shape index: {}]
  %s1 = inlined_call_operand.hbm [shape: bf16[128,128], index: 1, kind: input, shape index: {}]
  %s2 = inlined_call_operand.vmem [shape: f32[1,128], index: 2, kind: input, shape index: {}]
  %s3 = inlined_call_operand.hbm [shape: bf16[128,128], index: 3, kind: input, shape index: {}]
  %s4 = inlined_call_operand.vmem [shape: f32[1,128], index: 4, kind: input, shape index: {}]
  %s5 = inlined_call_operand.hbm [shape: bf16[16,128], index: 5, kind: output, shape index: {}]
  %s6 = sld [smem:[#allocation0]]
  $region42: #{tpu_custom_call.1} parent=0
    _
  %s8 = ssub.s32 1, %s6
  %s9 = scalar_select 0, %s8, %s6
  $region1: #{tpu_custom_call.1} parent=0
    #allocation2 [shape = 'u8[4096]{0}', space=vmem, size = 0x1000, scoped, tag = 'input window, operand 0, single buffered']
    #allocation3 [shape = 's32[1]{0}', space=sflag, size = 0x4, scoped, tag = 'scoped memory for tpu_custom_call.1']
    #allocation4 [shape = 's32[1]{0}', space=sflag, size = 0x4, scoped, tag = 'scoped memory for tpu_custom_call.1']
    #allocation5 [shape = 'u8[32768]{0}', space=vmem, size = 0x8000, scoped, tag = 'input window, operand 1, single buffered']
    #allocation6 [shape = 's32[1]{0}', space=sflag, size = 0x4, scoped, tag = 'scoped memory for tpu_custom_call.1']
    #allocation7 [shape = 'u8[32768]{0}', space=vmem, size = 0x8000, scoped, tag = 'input window, operand 3, single buffered']
    #allocation8 [shape = 'u8[4096]{0}', space=vmem, size = 0x1000, scoped, tag = 'output window, operand 0, single buffered']
    %10 = vsyncpa [#allocation3], 0
    %11 = vsyncpa [#allocation6], 0
    %12 = vsyncpa [#allocation4], 0
    // Predicated region
    $region2: #{tpu_custom_call.1} parent=1 // pred_check
      _
    $region3: #{tpu_custom_call.1} parent=1 // pred_check_branch
      %14 = sbr.rel (0) target = $region5
    $region4: #{tpu_custom_call.1} parent=1 // pred_region
      %s16 = ssub.s32 128, 128
      %17 = vsyncadd [#allocation3], %s16
      %s18 = sshll.u32 [#allocation2], 4
      %s19 = int_to_ptr.vmem [resolvable:$true] %s18
      %24 = dma.hbm_to_vmem [thread:$0]  %s0, 128, %s19, [#allocation3], 64, 64, 4
    $region5: #{tpu_custom_call.1} parent=1 // pred_fallthru
      _
    // Predicated region
    $region6: #{tpu_custom_call.1} parent=1 // pred_check
      _
    $region7: #{tpu_custom_call.1} parent=1 // pred_check_branch
      %26 = sbr.rel (0) target = $region9
    $region8: #{tpu_custom_call.1} parent=1 // pred_region
      %s28 = ssub.s32 1024, 1024
      %29 = vsyncadd [#allocation6], %s28
      %s30 = sshll.u32 [#allocation5], 4
      %s31 = int_to_ptr.vmem [resolvable:$true] %s30
      %36 = dma.hbm_to_vmem [thread:$0]  %s1, 1024, %s31, [#allocation6], 64, 64, 4
    $region9: #{tpu_custom_call.1} parent=1 // pred_fallthru
      _
    // Predicated region
    $region10: #{tpu_custom_call.1} parent=1 // pred_check
      _
    $region11: #{tpu_custom_call.1} parent=1 // pred_check_branch
      %38 = sbr.rel (0) target = $region13
    $region12: #{tpu_custom_call.1} parent=1 // pred_region
      _
    $region13: #{tpu_custom_call.1} parent=1 // pred_fallthru
      _
    // Predicated region
    $region14: #{tpu_custom_call.1} parent=1 // pred_check
      _
    $region15: #{tpu_custom_call.1} parent=1 // pred_check_branch
      %40 = sbr.rel (0) target = $region17
    $region16: #{tpu_custom_call.1} parent=1 // pred_region
      %s42 = ssub.s32 1024, 1024
      %43 = vsyncadd [#allocation6], %s42
      %s44 = sshll.u32 [#allocation7], 4
      %s45 = int_to_ptr.vmem [resolvable:$true] %s44
      %50 = dma.hbm_to_vmem [thread:$0]  %s3, 1024, %s45, [#allocation6], 64, 64, 4
    $region17: #{tpu_custom_call.1} parent=1 // pred_fallthru
      _
    // Predicated region
    $region18: #{tpu_custom_call.1} parent=1 // pred_check
      _
    $region19: #{tpu_custom_call.1} parent=1 // pred_check_branch
      %52 = sbr.rel (0) target = $region21
    $region20: #{tpu_custom_call.1} parent=1 // pred_region
      _
    $region21: #{tpu_custom_call.1} parent=1 // pred_fallthru
      _
    // Predicated region
    $region22: #{tpu_custom_call.1} parent=1 // pred_check
      _
    $region23: #{tpu_custom_call.1} parent=1 // pred_check_branch
      %54 = sbr.rel (0) target = $region25
    $region24: #{tpu_custom_call.1} parent=1 // pred_region
      %55 = dma.done [#allocation3], 128
    $region25: #{tpu_custom_call.1} parent=1 // pred_fallthru
      _
    // Predicated region
    $region26: #{tpu_custom_call.1} parent=1 // pred_check
      _
    $region27: #{tpu_custom_call.1} parent=1 // pred_check_branch
      %57 = sbr.rel (0) target = $region29
    $region28: #{tpu_custom_call.1} parent=1 // pred_region
      %58 = dma.done [#allocation6], 1024
    $region29: #{tpu_custom_call.1} parent=1 // pred_fallthru
      _
    // Predicated region
    $region30: #{tpu_custom_call.1} parent=1 // pred_check
      _
    $region31: #{tpu_custom_call.1} parent=1 // pred_check_branch
      %60 = sbr.rel (0) target = $region33
    $region32: #{tpu_custom_call.1} parent=1 // pred_region
      %61 = dma.done [#allocation6], 1024
    $region33: #{tpu_custom_call.1} parent=1 // pred_fallthru
      _
    %v63 = vld [vmem:[#allocation2] sm:$0xf]
    %v64 = vld [vmem:[#allocation2 + $0x4] sm:$0xf]
    %v65 = vld [vmem:[#allocation5] sm:$0xf]
    %v66 = vld [vmem:[#allocation5 + $0x4] sm:$0xf]
    %v67 = vld [vmem:[#allocation5 + $0x8] sm:$0xf]
    %v68 = vld [vmem:[#allocation5 + $0xc] sm:$0xf]
    %v69 = vld [vmem:[#allocation5 + $0x10] sm:$0xf]
    %v70 = vld [vmem:[#allocation5 + $0x14] sm:$0xf]
    %v71 = vld [vmem:[#allocation5 + $0x18] sm:$0xf]
    %v72 = vld [vmem:[#allocation5 + $0x1c] sm:$0xf]
    %v73 = vld [vmem:[#allocation5 + $0x20] sm:$0xf]
    %v74 = vld [vmem:[#allocation5 + $0x24] sm:$0xf]
    %v75 = vld [vmem:[#allocation5 + $0x28] sm:$0xf]
    %v76 = vld [vmem:[#allocation5 + $0x2c] sm:$0xf]
    %v77 = vld [vmem:[#allocation5 + $0x30] sm:$0xf]
    %v78 = vld [vmem:[#allocation5 + $0x34] sm:$0xf]
    %v79 = vld [vmem:[#allocation5 + $0x38] sm:$0xf]
    %v80 = vld [vmem:[#allocation5 + $0x3c] sm:$0xf]
    %v81 = vld [vmem:[%s2] sm:$0x1]
    %v83 = vlaneseq
    %v84 = vshrl.u32 %v83, 7
    %v85 = vsub.s32 0, %v84
    %v86 = vrot.slane %v81, %v85
    %v90 = vunpack.c.l.b16 %v63
    %v91 = vunpack.c.l.b16 %v64
    %v92 = vpack.c.b16 %v91, %v90
    %v110 = vunpack.c.l.b16 %v65
    %v111 = vunpack.c.l.b16 %v66
    %v112 = vunpack.c.l.b16 %v67
    %v113 = vunpack.c.l.b16 %v68
    %v114 = vunpack.c.l.b16 %v69
    %v115 = vunpack.c.l.b16 %v70
    %v116 = vunpack.c.l.b16 %v71
    %v117 = vunpack.c.l.b16 %v72
    %v118 = vunpack.c.l.b16 %v73
    %v119 = vunpack.c.l.b16 %v74
    %v120 = vunpack.c.l.b16 %v75
    %v121 = vunpack.c.l.b16 %v76
    %v122 = vunpack.c.l.b16 %v77
    %v123 = vunpack.c.l.b16 %v78
    %v124 = vunpack.c.l.b16 %v79
    %v125 = vunpack.c.l.b16 %v80
    %v126 = vpack.c.b16 %v111, %v110
    %v127 = vpack.c.b16 %v113, %v112
    %v128 = vpack.c.b16 %v115, %v114
    %v129 = vpack.c.b16 %v117, %v116
    %v130 = vpack.c.b16 %v119, %v118
    %v131 = vpack.c.b16 %v121, %v120
    %v132 = vpack.c.b16 %v123, %v122
    %v133 = vpack.c.b16 %v125, %v124
    %142 = vmatprep.subr.bf16.mxu0 0
    %143 = vmatpush1.bf16.msra.mxu0 %v133
    %144 = vmatprep.subr.bf16.mxu0 0
    %145 = vmatpush1.bf16.msra.mxu0 %v132
    %146 = vmatprep.subr.bf16.mxu0 0
    %147 = vmatpush1.bf16.msra.mxu0 %v131
    %148 = vmatprep.subr.bf16.mxu0 0
    %149 = vmatpush1.bf16.msra.mxu0 %v130
    %150 = vmatprep.subr.bf16.mxu0 0
    %151 = vmatpush1.bf16.msra.mxu0 %v129
    %152 = vmatprep.subr.bf16.mxu0 0
    %153 = vmatpush1.bf16.msra.mxu0 %v128
    %154 = vmatprep.subr.bf16.mxu0 0
    %155 = vmatpush1.bf16.msra.mxu0 %v127
    %156 = vmatprep.subr.bf16.mxu0 0
    %157 = vmatpush1.bf16.msra.mxu0 %v126
    %158 = vmatprep.subr.bf16.mxu0 0
    %159 = vmatpush2.bf16.msra.mxu0 0
    %160 = vmatprep.subr.bf16.mxu0 0
    %161 = vmatpush2.bf16.msra.mxu0 0
    %162 = vmatprep.subr.bf16.mxu0 0
    %163 = vmatpush2.bf16.msra.mxu0 0
    %164 = vmatprep.subr.bf16.mxu0 0
    %165 = vmatpush2.bf16.msra.mxu0 0
    %166 = vmatprep.subr.bf16.mxu0 0
    %167 = vmatpush2.bf16.msra.mxu0 0
    %168 = vmatprep.subr.bf16.mxu0 0
    %169 = vmatpush2.bf16.msra.mxu0 0
    %170 = vmatprep.subr.bf16.mxu0 0
    %171 = vmatpush2.bf16.msra.mxu0 0
    %172 = vmatprep.subr.bf16.mxu0 0
    %173 = vmatpush2.bf16.msra.mxu0 0
    %174 = vmatprep.mubr.bf16.mxu0 0
    %175 = vmatmul.mubr.bf16.gmra.mxu0 %v92
    %v176 = vpop.f32.mrf.mxu0
    %v177 = vadd.f32 %v86, %v176
    %v178 = vpop.f32.mrf.mxu0
    %v179 = vpop.f32.mrf.mxu0
    %v180 = vadd.f32 %v86, %v179
    %v181 = vpop.f32.mrf.mxu0
    %182 = vdwg.mxu0
    %v183 = vmax.f32 %v177, 0.0
    %v184 = vmax.f32 %v180, 0.0
    %v185 = vpack.c.bf16 %v184, %v183
    %v186 = vld [vmem:[#allocation7] sm:$0xf]
    %v187 = vld [vmem:[#allocation7 + $0x4] sm:$0xf]
    %v188 = vld [vmem:[#allocation7 + $0x8] sm:$0xf]
    %v189 = vld [vmem:[#allocation7 + $0xc] sm:$0xf]
    %v190 = vld [vmem:[#allocation7 + $0x10] sm:$0xf]
    %v191 = vld [vmem:[#allocation7 + $0x14] sm:$0xf]
    %v192 = vld [vmem:[#allocation7 + $0x18] sm:$0xf]
    %v193 = vld [vmem:[#allocation7 + $0x1c] sm:$0xf]
    %v194 = vld [vmem:[#allocation7 + $0x20] sm:$0xf]
    %v195 = vld [vmem:[#allocation7 + $0x24] sm:$0xf]
    %v196 = vld [vmem:[#allocation7 + $0x28] sm:$0xf]
    %v197 = vld [vmem:[#allocation7 + $0x2c] sm:$0xf]
    %v198 = vld [vmem:[#allocation7 + $0x30] sm:$0xf]
    %v199 = vld [vmem:[#allocation7 + $0x34] sm:$0xf]
    %v200 = vld [vmem:[#allocation7 + $0x38] sm:$0xf]
    %v201 = vld [vmem:[#allocation7 + $0x3c] sm:$0xf]
    %v202 = vld [vmem:[%s4] sm:$0x1]
    %v204 = vlaneseq
    %v205 = vshrl.u32 %v204, 7
    %v206 = vsub.s32 0, %v205
    %v207 = vrot.slane %v202, %v206
    %v225 = vunpack.c.l.b16 %v186
    %v226 = vunpack.c.l.b16 %v187
    %v227 = vunpack.c.l.b16 %v188
    %v228 = vunpack.c.l.b16 %v189
    %v229 = vunpack.c.l.b16 %v190
    %v230 = vunpack.c.l.b16 %v191
    %v231 = vunpack.c.l.b16 %v192
    %v232 = vunpack.c.l.b16 %v193
    %v233 = vunpack.c.l.b16 %v194
    %v234 = vunpack.c.l.b16 %v195
    %v235 = vunpack.c.l.b16 %v196
    %v236 = vunpack.c.l.b16 %v197
    %v237 = vunpack.c.l.b16 %v198
    %v238 = vunpack.c.l.b16 %v199
    %v239 = vunpack.c.l.b16 %v200
    %v240 = vunpack.c.l.b16 %v201
    %v241 = vpack.c.b16 %v226, %v225
    %v242 = vpack.c.b16 %v228, %v227
    %v243 = vpack.c.b16 %v230, %v229
    %v244 = vpack.c.b16 %v232, %v231
    %v245 = vpack.c.b16 %v234, %v233
    %v246 = vpack.c.b16 %v236, %v235
    %v247 = vpack.c.b16 %v238, %v237
    %v248 = vpack.c.b16 %v240, %v239
    %257 = vmatprep.subr.bf16.mxu0 0
    %258 = vmatpush1.bf16.msra.mxu0 %v248
    %259 = vmatprep.subr.bf16.mxu0 0
    %260 = vmatpush1.bf16.msra.mxu0 %v247
    %261 = vmatprep.subr.bf16.mxu0 0
    %262 = vmatpush1.bf16.msra.mxu0 %v246
    %263 = vmatprep.subr.bf16.mxu0 0
    %264 = vmatpush1.bf16.msra.mxu0 %v245
    %265 = vmatprep.subr.bf16.mxu0 0
    %266 = vmatpush1.bf16.msra.mxu0 %v244
    %267 = vmatprep.subr.bf16.mxu0 0
    %268 = vmatpush1.bf16.msra.mxu0 %v243
    %269 = vmatprep.subr.bf16.mxu0 0
    %270 = vmatpush1.bf16.msra.mxu0 %v242
    %271 = vmatprep.subr.bf16.mxu0 0
    %272 = vmatpush1.bf16.msra.mxu0 %v241
    %273 = vmatprep.subr.bf16.mxu0 0
    %274 = vmatpush2.bf16.msra.mxu0 0
    %275 = vmatprep.subr.bf16.mxu0 0
    %276 = vmatpush2.bf16.msra.mxu0 0
    %277 = vmatprep.subr.bf16.mxu0 0
    %278 = vmatpush2.bf16.msra.mxu0 0
    %279 = vmatprep.subr.bf16.mxu0 0
    %280 = vmatpush2.bf16.msra.mxu0 0
    %281 = vmatprep.subr.bf16.mxu0 0
    %282 = vmatpush2.bf16.msra.mxu0 0
    %283 = vmatprep.subr.bf16.mxu0 0
    %284 = vmatpush2.bf16.msra.mxu0 0
    %285 = vmatprep.subr.bf16.mxu0 0
    %286 = vmatpush2.bf16.msra.mxu0 0
    %287 = vmatprep.subr.bf16.mxu0 0
    %288 = vmatpush2.bf16.msra.mxu0 0
    %289 = vmatprep.mubr.bf16.mxu0 0
    %290 = vmatmul.mubr.bf16.gmra.mxu0 %v185
    %v291 = vpop.f32.mrf.mxu0
    %v292 = vadd.f32 %v207, %v291
    %v293 = vpop.f32.mrf.mxu0
    %v294 = vpop.f32.mrf.mxu0
    %v295 = vadd.f32 %v207, %v294
    %v296 = vpop.f32.mrf.mxu0
    %297 = vdwg.mxu0
    %v298 = vlaneseq
    %v299 = vand.u32 %v298, 127
    %vm300 = vcmp.lt.s32.totalorder %v299, 32
    %v301 = vmax.f32 %v292, 0.0
    %v302 = vmax.f32 %v295, 0.0
    %v303 = vsel %vm300, %v301, %v292
    %v304 = vsel %vm300, %v302, %v295
    %v305 = vpack.c.bf16 %v304, %v303
    %v307 = vunpack.c.l.b16 %v305
    %v308 = vunpack.c.h.b16 %v305
    %v309 = vpack.c.b16 %v307, %v307
    %v310 = vpack.c.b16 %v308, %v308
    %313 = vst [vmem:[#allocation8] sm:$0xf] %v309
    %314 = vst [vmem:[#allocation8 + $0x4] sm:$0xf] %v310
    // Predicated region
    $region34: #{tpu_custom_call.1} parent=1 // pred_check
      _
    $region35: #{tpu_custom_call.1} parent=1 // pred_check_branch
      %316 = sbr.rel (0) target = $region37
    $region36: #{tpu_custom_call.1} parent=1 // pred_region
      %s318 = ssub.s32 128, 128
      %319 = vsyncadd [#allocation4], %s318
      %s320 = sshll.u32 [#allocation8], 4
      %s321 = int_to_ptr.vmem [resolvable:$true] %s320
      %326 = dma.vmem_to_hbm [thread:$0]  %s321, 128, %s5, [#allocation4], 64, 64, 4
    $region37: #{tpu_custom_call.1} parent=1 // pred_fallthru
      _
    // Predicated region
    $region38: #{tpu_custom_call.1} parent=1 // pred_check
      _
    $region39: #{tpu_custom_call.1} parent=1 // pred_check_branch
      %328 = sbr.rel (0) target = $region41
    $region40: #{tpu_custom_call.1} parent=1 // pred_region
      %329 = dma.done [#allocation4], 128
    $region41: #{tpu_custom_call.1} parent=1 // pred_fallthru
      _
    %330 = vsyncpa [#allocation3], 1
    %331 = vsyncpa [#allocation6], 1
    %332 = vsyncpa [#allocation4], 1

</llo_original>
